<compile_context>
chip_gen: v7x
topology: tpu7x:2x2x1
jax: 0.10.0
libtpu: 0.0.40
codegen_flags: <defaults>
</compile_context>

<pallas_src>
import math

import jax
import jax.numpy as jnp
from jax.experimental import pallas as pl
from jax.experimental.pallas import tpu as pltpu


def _round_up(x, m):
    return ((x + m - 1) // m) * m


def _cdiv(a, b):
    return (a + b - 1) // b


def _vmem_capacity_bytes():
    try:
        return int(pltpu.get_tpu_info().vmem_capacity_bytes)
    except Exception:
        return 64 << 20  # conservative fallback = v7x per-TensorCore VMEM


def fold_spectral_weights(U, S1, S2):
    """One-time O(D^3) fold: W_k = U^T @ diag(|S_k|) @ U.

    Call once per parameter update and reuse across forwards; for M <~ D the
    fold otherwise dominates the per-call cost.
    """
    Uf = U.astype(jnp.float32)
    s1 = jnp.abs(S1).reshape(-1).astype(jnp.float32)
    s2 = jnp.abs(S2).reshape(-1).astype(jnp.float32)
    W1 = (Uf.T * s1[None, :]) @ Uf
    W2 = (Uf.T * s2[None, :]) @ Uf
    return W1, W2


def _spectral_matmul_kernel(x_ref, w_ref, o_ref):
    # Pure MXU hot path: one fused matmul per (tm, tn) output tile.
    o_ref[...] = jnp.dot(
        x_ref[...], w_ref[...], preferred_element_type=jnp.float32
    ).astype(o_ref.dtype)


def spectral_decomp_folded(x, W1, W2, *, tm=512, compute_dtype=None,
                           out_dtype=None):
    """Apply pre-folded weights: returns (x @ W1, x @ W2), same shape as x."""
    orig_shape = x.shape
    D = orig_shape[-1]
    M = 1
    for s in orig_shape[:-1]:
        M *= s
    x2d = x.reshape(M, D)

    if compute_dtype is None:
        compute_dtype = x.dtype
    if out_dtype is None:
        out_dtype = x.dtype
    in_sz = jnp.dtype(compute_dtype).itemsize
    w_sz = in_sz
    out_sz = jnp.dtype(out_dtype).itemsize

    # ---- Lane-dense, (8,128)-aligned padding targets ----------------------
    Dp = _round_up(D, 128)
    Np = 2 * Dp                       # fused output width: [W1 | W2]
    M8 = _round_up(max(M, 1), 8)

    # ---- Row tiling: pick the grid step count first (minimal padding) and
    # guarantee >= 2 steps so v7x's two TensorCores both get work. ----------
    gm = max(1, _cdiv(M8, max(8, _round_up(tm, 8))))
    if gm < 2 and M8 >= 16:
        gm = 2
    tm_eff = _round_up(_cdiv(M8, gm), 8)

    # ---- Per-generation VMEM budget & column tiling ------------------------
    vmem_cap = _vmem_capacity_bytes()
    budget = int(vmem_cap * 0.85)     # headroom for compiler internal scratch

    def tiles_bytes(tm_, tn_):
        # Conservatively assume double-buffering of every pipelined operand.
        return (2 * tm_ * Dp * in_sz          # x row tile
                + 2 * Dp * tn_ * w_sz          # [W1|W2] column slab
                + 2 * tm_ * tn_ * out_sz)      # fused output tile

    tn_eff = Np                        # fully-resident fused weights if it fits
    while tiles_bytes(tm_eff, tn_eff) > budget:
        smaller_tn = [t for t in (4096, 2048, 1024, 512, 256, 128)
                      if Np % t == 0 and t < tn_eff]
        if smaller_tn:
            tn_eff = smaller_tn[0]     # stream weight column slabs (large D)
            continue
        if tm_eff > 8:
            tm_eff = _round_up(max(8, tm_eff // 2), 8)
            continue
        break                          # smallest legal tiles; let Mosaic cope

    gm = max(1, _cdiv(M8, tm_eff))
    if gm < 2 and M8 >= 16:
        gm = 2
        tm_eff = _round_up(_cdiv(M8, gm), 8)
    Mp = gm * tm_eff
    gn = Np // tn_eff

    # ---- Pad operands (zero padding keeps results exact) -------------------
    x_p = x2d.astype(compute_dtype)
    if (Mp, Dp) != (M, D):
        x_p = jnp.pad(x_p, ((0, Mp - M), (0, Dp - D)))
    W1p, W2p = W1, W2
    if Dp != D:
        W1p = jnp.pad(W1p, ((0, Dp - D), (0, Dp - D)))
        W2p = jnp.pad(W2p, ((0, Dp - D), (0, Dp - D)))
    Wc = jnp.concatenate([W1p, W2p], axis=1).astype(compute_dtype)

    vmem_limit = min(max(int(1.5 * tiles_bytes(tm_eff, tn_eff)), 16 << 20),
                     budget)

    cost = pl.CostEstimate(
        flops=2 * Mp * Dp * Np,
        transcendentals=0,
        bytes_accessed=(Mp * Dp * in_sz + Dp * Np * w_sz + Mp * Np * out_sz),
    )

    # x keeps block index (i, 0) so it is NOT re-DMA'd across the column axis;
    # the weight slab only moves when j changes (never, when gn == 1).
    # TODO(synk): pipeline_mode=pl.Buffered(1) on the weight spec would halve
    # its resident VMEM when gn == 1; default buffering kept for portability.
    out_p = pl.pallas_call(
        _spectral_matmul_kernel,
        out_shape=jax.ShapeDtypeStruct((Mp, Np), out_dtype),
        grid_spec=pltpu.PrefetchScalarGridSpec(
            num_scalar_prefetch=0,
            grid=(gm, gn),
            in_specs=[
                pl.BlockSpec((tm_eff, Dp), lambda i, j: (i, 0)),   # x row tile
                pl.BlockSpec((Dp, tn_eff), lambda i, j: (0, j)),   # [W1|W2] slab
            ],
            out_specs=pl.BlockSpec((tm_eff, tn_eff), lambda i, j: (i, j)),
        ),
        compiler_params=pltpu.CompilerParams(
            dimension_semantics=("parallel", "parallel"),
            vmem_limit_bytes=vmem_limit,
        ),
        cost_estimate=cost,
    )(x_p, Wc)

    x1 = out_p[:M, :D].reshape(orig_shape)
    x2 = out_p[:M, Dp:Dp + D].reshape(orig_shape)
    return x1, x2


def spectral_decomp(x, U, S1, S2, *, tm=512, compute_dtype=None,
                    out_dtype=None):
    """x: (..., D); U: (D, D); S1, S2: (D,) or (D, 1). Returns (x1, x2)."""
    W1, W2 = fold_spectral_weights(U, S1, S2)
    return spectral_decomp_folded(x, W1, W2, tm=tm,
                                  compute_dtype=compute_dtype,
                                  out_dtype=out_dtype)


def init_params(key, dim):
    """Deterministic init matching the PyTorch module's reset_parameters."""
    k_u, k_s1, k_s2 = jax.random.split(key, 3)

    # xavier_uniform_ for U (dim, dim): bound = sqrt(6 / (dim + dim))
    xav_bound = math.sqrt(6.0 / (dim + dim))
    U = jax.random.uniform(k_u, (dim, dim), jnp.float32,
                           minval=-xav_bound, maxval=xav_bound)

    # kaiming_uniform_(nonlinearity='relu') for S of shape (dim, 1):
    # fan_in = 1, gain = sqrt(2), bound = gain * sqrt(3 / fan_in) = sqrt(6)
    km_bound = math.sqrt(2.0) * math.sqrt(3.0 / 1.0)
    S1 = jax.random.uniform(k_s1, (dim,), jnp.float32,
                            minval=-km_bound, maxval=km_bound)
    S2 = jax.random.uniform(k_s2, (dim,), jnp.float32,
                            minval=-km_bound, maxval=km_bound)
    return U, S1, S2


if __name__ == "__main__":
    key = jax.random.PRNGKey(0)
    k_param, k_x = jax.random.split(key)

    batch, seq, dim = 2, 8, 32
    U, S1, S2 = init_params(k_param, dim)
    x = jax.random.normal(k_x, (batch, seq, dim), jnp.float32)

    fwd = jax.jit(spectral_decomp)
    x1, x2 = fwd(x, U, S1, S2)
    jax.block_until_ready((x1, x2))

    # Pure-JAX reference (same operation order as the PyTorch module).
    def ref(xr, Ur, Sr):
        return xr @ Ur.T @ jnp.diag(jnp.abs(Sr)) @ Ur

    x2d = x.reshape(batch * seq, dim)
    r1 = ref(x2d, U, S1).reshape(batch, seq, dim)
    r2 = ref(x2d, U, S2).reshape(batch, seq, dim)
    assert jnp.allclose(x1, r1, atol=1e-4, rtol=1e-4)
    assert jnp.allclose(x2, r2, atol=1e-4, rtol=1e-4)

    print("KERNEL_OK")
</pallas_src>

<mosaic_0001>
module attributes {stable_mosaic.version = 11 : i64} {
  func.func @_spectral_matmul_kernel(%arg0: i32, %arg1: i32, %arg2: memref<8x128xf32, #tpu.memory_space<vmem>>, %arg3: memref<128x256xf32, #tpu.memory_space<vmem>>, %arg4: memref<8x256xf32, #tpu.memory_space<vmem>>) attributes {dimension_semantics = [#tpu.dimension_semantics<parallel>, #tpu.dimension_semantics<parallel>], iteration_bounds = array<i64: 2, 1>, scalar_prefetch = 0 : i64, scratch_operands = 0 : i64, tpu.core_type = #tpu.core_type<tc>, window_params = [{transform_indices = @transform_0, window_bounds = array<i64: 8, 128>}, {transform_indices = @transform_1, window_bounds = array<i64: 128, 256>}, {transform_indices = @transform_2, window_bounds = array<i64: 8, 256>}]} {
    %c0 = arith.constant 0 : index
    %c0_0 = arith.constant 0 : index
    %0 = vector.load %arg2[%c0, %c0_0] : memref<8x128xf32, #tpu.memory_space<vmem>>, vector<8x128xf32>
    %c0_1 = arith.constant 0 : index
    %c0_2 = arith.constant 0 : index
    %1 = vector.load %arg3[%c0_1, %c0_2] : memref<128x256xf32, #tpu.memory_space<vmem>>, vector<128x256xf32>
    %cst = arith.constant dense<0.000000e+00> : vector<8x256xf32>
    %2 = tpu.matmul %0, %1, %cst {dimension_numbers = #tpu.dot_dimension_numbers<[1], [0], [0], [1], [0, 0, 1, 1], [], []>} : vector<8x128xf32>, vector<128x256xf32>, vector<8x256xf32> -> vector<8x256xf32>
    %c0_3 = arith.constant 0 : index
    %c0_4 = arith.constant 0 : index
    %3 = vector.load %arg4[%c0_3, %c0_4] : memref<8x256xf32, #tpu.memory_space<vmem>>, vector<8x256xf32>
    tpu.vector_store %arg4[%c0_3, %c0_4], %2 {strides = array<i32>} : memref<8x256xf32, #tpu.memory_space<vmem>>, vector<8x256xf32>,
    return
  }
  func.func @transform_0(%arg0: i32, %arg1: i32) -> (i32, i32) {
    %c0_i32 = arith.constant 0 : i32
    %c0_i32_0 = arith.constant 0 : i32
    return %arg0, %c0_i32 : i32, i32
  }
  func.func @transform_1(%arg0: i32, %arg1: i32) -> (i32, i32) {
    %c0_i32 = arith.constant 0 : i32
    %c0_i32_0 = arith.constant 0 : i32
    return %c0_i32, %arg1 : i32, i32
  }
  func.func @transform_2(%arg0: i32, %arg1: i32) -> (i32, i32) {
    %c0_i32 = arith.constant 0 : i32
    return %arg0, %arg1 : i32, i32
  }
}

</mosaic_0001>

<llo_original>
// kernel: spectral_decomp.1
$region0: #{spectral_decomp.1}
  #allocation0 [shape = 'u32[]', space=smem, size = 0x4, offset = 0x4, fixed_abs, tag = 'smem constant byte address 0x4 - core index']
  #allocation1 [shape = 'u32[144,128]{1,0:T(1,128)}', space=vmem, size = 0x12000, scoped, tag = 'internal scratch']
  %s0 = inlined_call_operand.vmem [shape: f32[16,128], index: 0, kind: input, shape index: {}]
  %s1 = inlined_call_operand.vmem [shape: f32[128,256], index: 1, kind: input, shape index: {}]
  %s2 = inlined_call_operand.vmem [shape: f32[16,256], index: 2, kind: output, shape index: {}]
  %s3 = sld [smem:[#allocation0]]
  $region41: #{spectral_decomp.1} parent=0
    _
  %s5 = ssub.s32 1, %s3
  %s6 = scalar_select 0, %s5, %s3
  loop: start=0, step=1, limit=4
  $region2: #{spectral_decomp.1} parent=0 // loop_pre_header
    _
  $region3: #{spectral_decomp.1} parent=0 // loop_header
    %s8 = sphi 0, %s12
    %p9 = scmp.ge.s32.totalorder %s8, 4
    %s15 = sphi 0, %s27
    %s16 = sphi 0, %s23
    %s17 = sphi 0, %s15
    %s18 = sphi 0, %s16
    %s19 = sphi 0, %s17
    %s20 = sphi 0, %s18
    %s30 = sphi 0, %s32
    %s33 = sphi 0, %s30
    %s34 = sphi 0, %s33
    %s50 = sphi 0, %s34
    %s56 = sphi 0, %s58
    %s59 = sphi 0, %s56
    %s60 = sphi 0, %s59
    %s76 = sphi 0, %s60
    %s84 = sphi 0, %s86
    %s87 = sphi 0, %s84
    %s88 = sphi 0, %s87
    %s104 = sphi 0, %s88
  $region4: #{spectral_decomp.1} parent=0 // loop_header_branch
    %11 = sbr.rel (%p9) target = $region8
  $region5: #{spectral_decomp.1} parent=0 // loop_body
    %s13 = ssub.s32 %s8, 1
    %s14 = ssub.s32 %s8, 2
    %s21 = sadd.s32 1, %s16
    %p22 = scmp.ge.s32.totalorder %s21, 1
    %s23 = scalar_select %p22, 0, %s21
    %s24 = sadd.s32 1, %s15
    %s25 = scalar_select %p22, %s24, %s15
    %p26 = scmp.ge.s32.totalorder %s25, 2
    %s27 = scalar_select %p26, 0, %s25
    %s28 = ssub.s32 %s15, %s27
    %p29 = scmp.eq.s32.totalorder %s28, 0
    %s31 = sadd.s32 %s30, 1
    %s32 = scalar_select %p29, %s30, %s31
    %p35 = pneg %p29
    %p36 = scmp.eq.s32.totalorder %s8, 1
    %p37 = por %p35, %p36
    %p38 = scmp.ne.s32.totalorder %s30, %s33
    %p39 = scmp.eq.s32.totalorder %s8, 0
    %p40 = por %p38, %p39
    %p41 = scmp.ne.s32.totalorder %s30, %s33
    %p42 = scmp.eq.s32.totalorder %s13, 1
    %p43 = por %p41, %p42
    %p44 = scmp.ne.s32.totalorder %s33, %s34
    %p45 = scmp.eq.s32.totalorder %s13, 0
    %p46 = por %p44, %p45
    %p47 = scmp.ne.s32.totalorder %s33, %s34
    %p48 = scmp.eq.s32.totalorder %s14, 1
    %p49 = por %p47, %p48
    %p51 = scmp.ne.s32.totalorder %s34, %s50
    %p52 = scmp.eq.s32.totalorder %s14, 0
    %p53 = por %p51, %p52
    %s54 = ssub.s32 %s16, %s23
    %p55 = scmp.eq.s32.totalorder %s54, 0
    %s57 = sadd.s32 %s56, 1
    %s58 = scalar_select %p55, %s56, %s57
    %p61 = pneg %p55
    %p62 = scmp.eq.s32.totalorder %s8, 1
    %p63 = por %p61, %p62
    %p64 = scmp.ne.s32.totalorder %s56, %s59
    %p65 = scmp.eq.s32.totalorder %s8, 0
    %p66 = por %p64, %p65
    %p67 = scmp.ne.s32.totalorder %s56, %s59
    %p68 = scmp.eq.s32.totalorder %s13, 1
    %p69 = por %p67, %p68
    %p70 = scmp.ne.s32.totalorder %s59, %s60
    %p71 = scmp.eq.s32.totalorder %s13, 0
    %p72 = por %p70, %p71
    %p73 = scmp.ne.s32.totalorder %s59, %s60
    %p74 = scmp.eq.s32.totalorder %s14, 1
    %p75 = por %p73, %p74
    %p77 = scmp.ne.s32.totalorder %s60, %s76
    %p78 = scmp.eq.s32.totalorder %s14, 0
    %p79 = por %p77, %p78
    %s80 = ssub.s32 %s15, %s27
    %s81 = ssub.s32 %s16, %s23
    %s82 = sor.u32 %s80, %s81
    %p83 = scmp.eq.s32.totalorder %s82, 0
    %s85 = sadd.s32 %s84, 1
    %s86 = scalar_select %p83, %s84, %s85
    %p89 = pneg %p83
    %p90 = scmp.eq.s32.totalorder %s8, 1
    %p91 = por %p89, %p90
    %p92 = scmp.ne.s32.totalorder %s84, %s87
    %p93 = scmp.eq.s32.totalorder %s8, 0
    %p94 = por %p92, %p93
    %p95 = scmp.ne.s32.totalorder %s84, %s87
    %p96 = scmp.eq.s32.totalorder %s13, 1
    %p97 = por %p95, %p96
    %p98 = scmp.ne.s32.totalorder %s87, %s88
    %p99 = scmp.eq.s32.totalorder %s13, 0
    %p100 = por %p98, %p99
    %p101 = scmp.ne.s32.totalorder %s87, %s88
    %p102 = scmp.eq.s32.totalorder %s14, 1
    %p103 = por %p101, %p102
    %p105 = scmp.ne.s32.totalorder %s88, %s104
    %p106 = scmp.eq.s32.totalorder %s14, 0
    %p107 = por %p105, %p106
    %p108 = scmp.le.s32.totalorder 1, %s8
    %p109 = scmp.lt.s32.totalorder %s8, 3
    %p110 = pnand %p108, %p109
    %p111 = pneg %p110
    // Predicated region
    $region9: #{spectral_decomp.1} parent=5 // pred_check
      _
    $region10: #{spectral_decomp.1} parent=5 // pred_check_branch
      %113 = sbr.rel (%p110) target = $region12
    $region11: #{spectral_decomp.1} parent=5 // pred_region
      %s114 = ssub.s32 %s8, 1
      // Predicated region
      $region13: #{spectral_decomp.1} parent=11 // pred_check
        %p115 = pneg %p72
      $region14: #{spectral_decomp.1} parent=11 // pred_check_branch
        %117 = sbr.rel (%p115) target = $region16
      $region15: #{spectral_decomp.1} parent=11 // pred_region
        %s118 = smul.u32 2, %s18
        %p119 = scmp.lt.s32.totalorder %s118, 1
        %s120 = scalar_select %p119, %s118, 1
        %s121 = smul.addr %s120, 8
        %s122 = scalar_lea.vmem %s1, %s121
        %s123 = smul.u32 2, %s18
      $region16: #{spectral_decomp.1} parent=11 // pred_fallthru
        _
    $region12: #{spectral_decomp.1} parent=5 // pred_fallthru
      _
    %p124 = scmp.lt.s32.totalorder %s8, 2
    // Predicated region
    $region17: #{spectral_decomp.1} parent=5 // pred_check
      %p125 = pneg %p124
    $region18: #{spectral_decomp.1} parent=5 // pred_check_branch
      %127 = sbr.rel (%p125) target = $region20
    $region19: #{spectral_decomp.1} parent=5 // pred_region
      // Predicated region
      $region21: #{spectral_decomp.1} parent=19 // pred_check
        %p128 = pneg %p40
      $region22: #{spectral_decomp.1} parent=19 // pred_check_branch
        %130 = sbr.rel (%p128) target = $region24
      $region23: #{spectral_decomp.1} parent=19 // pred_region
        %p131 = scmp.lt.s32.totalorder %s15, 1
        %s132 = scalar_select %p131, %s15, 1
        %s133 = smul.addr %s132, 8
        %s134 = scalar_lea.vmem %s0, %s133
      $region24: #{spectral_decomp.1} parent=19 // pred_fallthru
        _
    $region20: #{spectral_decomp.1} parent=5 // pred_fallthru
      _
    %p135 = scmp.le.s32.totalorder 1, %s8
    %p136 = scmp.lt.s32.totalorder %s8, 3
    %p137 = pnand %p135, %p136
    %p138 = pneg %p137
    // Predicated region
    $region25: #{spectral_decomp.1} parent=5 // pred_check
      _
    $region26: #{spectral_decomp.1} parent=5 // pred_check_branch
      %140 = sbr.rel (%p137) target = $region28
    $region27: #{spectral_decomp.1} parent=5 // pred_region
      %s141 = ssub.s32 %s8, 1
      %p142 = scmp.lt.s32.totalorder %s17, 1
      %s143 = scalar_select %p142, %s17, 1
      %s144 = smul.addr %s143, 8
      %s145 = scalar_lea.vmem %s0, %s144
      %p146 = pneg %p46
      %p147 = pneg %p43
      %s148 = smul.u32 2, %s18
      %p149 = scmp.lt.s32.totalorder %s148, 1
      %s150 = scalar_select %p149, %s148, 1
      %s151 = smul.addr %s150, 8
      %s152 = scalar_lea.vmem %s1, %s151
      %p153 = pneg %p72
      %p154 = pneg %p69
      %p155 = pneg %p100
      %p156 = pneg %p97
      %s157 = smul.u32 2, %s18
      %p158 = scmp.lt.s32.totalorder %s17, 1
      %s159 = scalar_select %p158, %s17, 1
      %p160 = scmp.lt.s32.totalorder %s157, 1
      %s161 = scalar_select %p160, %s157, 1
      %s162 = smul.addr %s159, 2
      %s163 = sadd.s32 %s161, %s162
      %s164 = smul.addr %s163, 8
      %s165 = scalar_lea.vmem %s2, %s164
      %p166 = scmp.lt.s32.totalorder %s17, 1
      %s167 = scalar_select %p166, %s17, 1
      %s168 = smul.addr %s167, 8
      %s169 = scalar_lea.vmem %s0, %s168
      %s170 = smul.u32 2, %s18
      %p171 = scmp.lt.s32.totalorder %s170, 1
      %s172 = scalar_select %p171, %s170, 1
      %s173 = smul.addr %s172, 8
      %s174 = scalar_lea.vmem %s1, %s173
      %s175 = smul.u32 2, %s18
      %s176 = smul.u32 2, %s18
      %p177 = scmp.lt.s32.totalorder %s17, 1
      %s178 = scalar_select %p177, %s17, 1
      %p179 = scmp.lt.s32.totalorder %s176, 1
      %s180 = scalar_select %p179, %s176, 1
      %s181 = smul.addr %s178, 2
      %s182 = sadd.s32 %s180, %s181
      %s183 = smul.addr %s182, 8
      %s184 = scalar_lea.vmem %s2, %s183
      %s185 = smul.u32 2, %s18
      %v186 = vld [vmem:[%s169] sm:$0xff]
      %v187 = vld [vmem:[%s174] sm:$0xff]
      %v188 = vld [vmem:[%s174 + $0x8] sm:$0xff]
      %v189 = vld [vmem:[%s174 + $0x10] sm:$0xff]
      %v190 = vld [vmem:[%s174 + $0x18] sm:$0xff]
      %v191 = vld [vmem:[%s174 + $0x20] sm:$0xff]
      %v192 = vld [vmem:[%s174 + $0x28] sm:$0xff]
      %v193 = vld [vmem:[%s174 + $0x30] sm:$0xff]
      %v194 = vld [vmem:[%s174 + $0x38] sm:$0xff]
      %v195 = vld [vmem:[%s174 + $0x40] sm:$0xff]
      %v196 = vld [vmem:[%s174 + $0x48] sm:$0xff]
      %v197 = vld [vmem:[%s174 + $0x50] sm:$0xff]
      %v198 = vld [vmem:[%s174 + $0x58] sm:$0xff]
      %v199 = vld [vmem:[%s174 + $0x60] sm:$0xff]
      %v200 = vld [vmem:[%s174 + $0x68] sm:$0xff]
      %v201 = vld [vmem:[%s174 + $0x70] sm:$0xff]
      %v202 = vld [vmem:[%s174 + $0x78] sm:$0xff]
      %v203 = vld [vmem:[%s174 + $0x80] sm:$0xff]
      %v204 = vld [vmem:[%s174 + $0x88] sm:$0xff]
      %v205 = vld [vmem:[%s174 + $0x90] sm:$0xff]
      %v206 = vld [vmem:[%s174 + $0x98] sm:$0xff]
      %v207 = vld [vmem:[%s174 + $0xa0] sm:$0xff]
      %v208 = vld [vmem:[%s174 + $0xa8] sm:$0xff]
      %v209 = vld [vmem:[%s174 + $0xb0] sm:$0xff]
      %v210 = vld [vmem:[%s174 + $0xb8] sm:$0xff]
      %v211 = vld [vmem:[%s174 + $0xc0] sm:$0xff]
      %v212 = vld [vmem:[%s174 + $0xc8] sm:$0xff]
      %v213 = vld [vmem:[%s174 + $0xd0] sm:$0xff]
      %v214 = vld [vmem:[%s174 + $0xd8] sm:$0xff]
      %v215 = vld [vmem:[%s174 + $0xe0] sm:$0xff]
      %v216 = vld [vmem:[%s174 + $0xe8] sm:$0xff]
      %v217 = vld [vmem:[%s174 + $0xf0] sm:$0xff]
      %v218 = vld [vmem:[%s174 + $0xf8] sm:$0xff]
      %219 = vmatprep.subr.mxu0 %v188
      %220 = vmatpush1.msra.mxu0 %v187
      %221 = vmatprep.subr.mxu0 %v190
      %222 = vmatpush1.msra.mxu0 %v189
      %223 = vmatprep.subr.mxu0 %v192
      %224 = vmatpush1.msra.mxu0 %v191
      %225 = vmatprep.subr.mxu0 %v194
      %226 = vmatpush1.msra.mxu0 %v193
      %227 = vmatprep.subr.mxu0 %v196
      %228 = vmatpush1.msra.mxu0 %v195
      %229 = vmatprep.subr.mxu0 %v198
      %230 = vmatpush1.msra.mxu0 %v197
      %231 = vmatprep.subr.mxu0 %v200
      %232 = vmatpush1.msra.mxu0 %v199
      %233 = vmatprep.subr.mxu0 %v202
      %234 = vmatpush1.msra.mxu0 %v201
      %235 = vmatprep.subr.mxu0 %v204
      %236 = vmatpush1.msra.mxu0 %v203
      %237 = vmatprep.subr.mxu0 %v206
      %238 = vmatpush1.msra.mxu0 %v205
      %239 = vmatprep.subr.mxu0 %v208
      %240 = vmatpush1.msra.mxu0 %v207
      %241 = vmatprep.subr.mxu0 %v210
      %242 = vmatpush1.msra.mxu0 %v209
      %243 = vmatprep.subr.mxu0 %v212
      %244 = vmatpush1.msra.mxu0 %v211
      %245 = vmatprep.subr.mxu0 %v214
      %246 = vmatpush1.msra.mxu0 %v213
      %247 = vmatprep.subr.mxu0 %v216
      %248 = vmatpush1.msra.mxu0 %v215
      %249 = vmatprep.subr.mxu0 %v218
      %250 = vmatpush1.msra.mxu0 %v217
      %251 = vmatprep.subr.mxu0 0.0
      %252 = vmatpush1.msra.mxu0 0.0
      %253 = vmatprep.subr.mxu0 0.0
      %254 = vmatpush1.msra.mxu0 0.0
      %255 = vmatprep.subr.mxu0 0.0
      %256 = vmatpush1.msra.mxu0 0.0
      %257 = vmatprep.subr.mxu0 0.0
      %258 = vmatpush1.msra.mxu0 0.0
      %259 = vmatprep.subr.mxu0 0.0
      %260 = vmatpush1.msra.mxu0 0.0
      %261 = vmatprep.subr.mxu0 0.0
      %262 = vmatpush1.msra.mxu0 0.0
      %263 = vmatprep.subr.mxu0 0.0
      %264 = vmatpush1.msra.mxu0 0.0
      %265 = vmatprep.subr.mxu0 0.0
      %266 = vmatpush1.msra.mxu0 0.0
      %267 = vmatprep.subr.mxu0 0.0
      %268 = vmatpush1.msra.mxu0 0.0
      %269 = vmatprep.subr.mxu0 0.0
      %270 = vmatpush1.msra.mxu0 0.0
      %271 = vmatprep.subr.mxu0 0.0
      %272 = vmatpush1.msra.mxu0 0.0
      %273 = vmatprep.subr.mxu0 0.0
      %274 = vmatpush1.msra.mxu0 0.0
      %275 = vmatprep.subr.mxu0 0.0
      %276 = vmatpush1.msra.mxu0 0.0
      %277 = vmatprep.subr.mxu0 0.0
      %278 = vmatpush1.msra.mxu0 0.0
      %279 = vmatprep.subr.mxu0 0.0
      %280 = vmatpush1.msra.mxu0 0.0
      %281 = vmatprep.subr.mxu0 0.0
      %282 = vmatpush1.msra.mxu0 0.0
      %283 = vmatprep.mubr.f32.mxu0 0.0
      %284 = vmatmul.mubr.f32.gmra.mrb[0].mxu0 %v186
      %v285 = vpop.f32.mrb[0].mxu0
      %v286 = vadd.f32 0.0, %v285
      %v287 = vpop.f32.mrb[0].mxu0
      %v288 = vadd.f32 0.0, %v287
      %289 = vdwg.mxu0
      %290 = vst [vmem:[%s184] sm:$0xff] %v286
      %291 = vst [vmem:[%s184 + $0x8] sm:$0xff] %v288
      %s292 = smul.u32 2, %s18
      %p293 = scmp.lt.s32.totalorder %s17, 1
      %s294 = scalar_select %p293, %s17, 1
      %p295 = scmp.lt.s32.totalorder %s292, 1
      %s296 = scalar_select %p295, %s292, 1
      %s297 = smul.addr %s294, 2
      %s298 = sadd.s32 %s296, %s297
      %s299 = smul.addr %s298, 8
      %s300 = scalar_lea.vmem %s2, %s299
      // Predicated region
      $region29: #{spectral_decomp.1} parent=27 // pred_check
        %p301 = pneg %p97
      $region30: #{spectral_decomp.1} parent=27 // pred_check_branch
        %303 = sbr.rel (%p301) target = $region32
      $region31: #{spectral_decomp.1} parent=27 // pred_region
        %s304 = smul.u32 2, %s18
      $region32: #{spectral_decomp.1} parent=27 // pred_fallthru
        _
    $region28: #{spectral_decomp.1} parent=5 // pred_fallthru
      _
    %p305 = scmp.le.s32.totalorder 2, %s8
    // Predicated region
    $region33: #{spectral_decomp.1} parent=5 // pred_check
      %p306 = pneg %p305
    $region34: #{spectral_decomp.1} parent=5 // pred_check_branch
      %308 = sbr.rel (%p306) target = $region36
    $region35: #{spectral_decomp.1} parent=5 // pred_region
      %s309 = ssub.s32 %s8, 2
      // Predicated region
      $region37: #{spectral_decomp.1} parent=35 // pred_check
        %p310 = pneg %p103
      $region38: #{spectral_decomp.1} parent=35 // pred_check_branch
        %312 = sbr.rel (%p310) target = $region40
      $region39: #{spectral_decomp.1} parent=35 // pred_region
        %s313 = smul.u32 2, %s20
        %p314 = scmp.lt.s32.totalorder %s19, 1
        %s315 = scalar_select %p314, %s19, 1
        %p316 = scmp.lt.s32.totalorder %s313, 1
        %s317 = scalar_select %p316, %s313, 1
        %s318 = smul.addr %s315, 2
        %s319 = sadd.s32 %s317, %s318
        %s320 = smul.addr %s319, 8
        %s321 = scalar_lea.vmem %s2, %s320
      $region40: #{spectral_decomp.1} parent=35 // pred_fallthru
        _
    $region36: #{spectral_decomp.1} parent=5 // pred_fallthru
      _
  $region6: #{spectral_decomp.1} parent=0 // loop_footer
    %s12 = sadd.s32 1, %s8
  $region7: #{spectral_decomp.1} parent=0 // loop_footer_branch
    %7 = sbr.rel target = $region3
  $region8: #{spectral_decomp.1} parent=0 // loop_exit
    _

</llo_original>
